<compile_context>
chip_gen: v6e
topology: v6e:2x2x1
jax: 0.10.0
libtpu: 0.0.40
codegen_flags: <defaults>
</compile_context>

<pallas_src>
import jax
import jax.numpy as jnp
from jax.experimental import pallas as pl
from jax.experimental.pallas import tpu as pltpu


def _round_up(x, m):
    return ((x + m - 1) // m) * m


def qnetwork_kernel(x_ref, w1_ref, b1_ref, w2_ref, b2_ref, w3_ref, b3_ref, out_ref):
    # Three fused matmul + bias + ReLU stages; MXU accumulates in f32.
    x = x_ref[...]
    h1 = jnp.dot(x, w1_ref[...], preferred_element_type=jnp.float32) + b1_ref[...]
    h1 = jnp.maximum(h1, 0.0)
    h2 = jnp.dot(h1, w2_ref[...], preferred_element_type=jnp.float32) + b2_ref[...]
    h2 = jnp.maximum(h2, 0.0)
    h3 = jnp.dot(h2, w3_ref[...], preferred_element_type=jnp.float32) + b3_ref[...]
    # The reference module applies ReLU to the final (fc3) layer as well.
    out_ref[...] = jnp.maximum(h3, 0.0).astype(out_ref.dtype)


def _pick_batch_tile(B, max_tile=2048):
    """Single grid step for small batches; >=2 steps otherwise (v7x megacore).
    Tile = round_up(cdiv(B, n_steps), 8) so the batch pads by at most 7 rows
    per step instead of up to ~2x."""
    if B <= 256:
        n_steps = 1
    else:
        n_steps = max(2, pl.cdiv(B, max_tile))
    return _round_up(pl.cdiv(B, n_steps), 8)


def qnetwork_forward(state, params, *, batch_tile=None):
    """state: [B, state_size] float32.
    params: dict of w1,b1,w2,b2,w3,b3 (w: [in, out], b: [1, out]).
    No per-call weight preparation is performed (nothing to hoist)."""
    w1, b1 = params["w1"], params["b1"]
    w2, b2 = params["w2"], params["b2"]
    w3, b3 = params["w3"], params["b3"]

    B, S = state.shape
    F1 = w1.shape[1]
    F2 = w2.shape[1]
    A = w3.shape[1]

    if batch_tile is None:
        batch_tile = _pick_batch_tile(B)
    batch_tile = _round_up(batch_tile, 8)          # f32 sublane constraint
    B_pad = _round_up(B, batch_tile)

    x = state
    if B_pad != B:                                 # pad rows only, never lanes
        x = jnp.pad(x, ((0, B_pad - B), (0, 0)))

    grid = (B_pad // batch_tile,)

    def build(weight_pipeline_mode):
        def wspec(shape):
            # Grid-invariant weights/biases (constant index_map).
            if weight_pipeline_mode is None:
                return pl.BlockSpec(shape, lambda i: (0, 0))
            return pl.BlockSpec(shape, lambda i: (0, 0),
                                pipeline_mode=weight_pipeline_mode)

        return pl.pallas_call(
            qnetwork_kernel,
            out_shape=jax.ShapeDtypeStruct((B_pad, A), jnp.float32),
            grid_spec=pl.GridSpec(
                grid=grid,
                in_specs=[
                    # activations: tiled over batch; feature dim left at S=8
                    pl.BlockSpec((batch_tile, S), lambda i: (i, 0)),
                    wspec((S, F1)),
                    wspec((1, F1)),
                    wspec((F1, F2)),
                    wspec((1, F2)),
                    wspec((F2, A)),
                    wspec((1, A)),
                ],
                # output stays A=4 wide: masked 4-lane stores cost far less
                # than 32x the HBM bytes of a 128-lane padded output.
                out_specs=pl.BlockSpec((batch_tile, A), lambda i: (i, 0)),
            ),
            compiler_params=pltpu.CompilerParams(
                dimension_semantics=("parallel",),
            ),
        )

    try:
        # Single-buffer the resident weights (don't reserve 2x their VMEM).
        out = build(pl.Buffered(1))(x, w1, b1, w2, b2, w3, b3)
    except Exception:
        # Fallback if this jax build rejects buffer_count=1 for pallas_call.
        out = build(None)(x, w1, b1, w2, b2, w3, b3)

    if B_pad != B:
        out = out[:B]
    return out


def init_params(key, state_size, action_size, fc1_nodes=64, fc2_nodes=64):
    """Deterministic init mimicking nn.Linear's uniform(-1/sqrt(fan_in), +1/sqrt(fan_in))."""
    ks = jax.random.split(key, 6)

    def linear(kw, kb, fan_in, fan_out):
        bound = 1.0 / jnp.sqrt(fan_in)
        w = jax.random.uniform(kw, (fan_in, fan_out), jnp.float32, -bound, bound)
        b = jax.random.uniform(kb, (1, fan_out), jnp.float32, -bound, bound)
        return w, b

    w1, b1 = linear(ks[0], ks[1], state_size, fc1_nodes)
    w2, b2 = linear(ks[2], ks[3], fc1_nodes, fc2_nodes)
    w3, b3 = linear(ks[4], ks[5], fc2_nodes, action_size)
    return {"w1": w1, "b1": b1, "w2": w2, "b2": b2, "w3": w3, "b3": b3}


def reference_forward(state, p):
    # Matches the PyTorch spec: ReLU after every layer, including fc3.
    h1 = jnp.maximum(state @ p["w1"] + p["b1"], 0.0)
    h2 = jnp.maximum(h1 @ p["w2"] + p["b2"], 0.0)
    return jnp.maximum(h2 @ p["w3"] + p["b3"], 0.0)


if __name__ == "__main__":
    # LunarLander-v2: state_size=8, action_size=4.
    state_size, action_size = 8, 4
    fc1_nodes, fc2_nodes = 64, 64

    key = jax.random.PRNGKey(0)
    k_params, k_small, k_tiny, k_big = jax.random.split(key, 4)
    params = init_params(k_params, state_size, action_size, fc1_nodes, fc2_nodes)

    # --- small batch: single grid step, no padding at all ---
    batch = 16
    state = jax.random.normal(k_small, (batch, state_size), dtype=jnp.float32)
    out = jax.block_until_ready(qnetwork_forward(state, params))
    ref = reference_forward(state, params)
    assert out.shape == (batch, action_size)
    assert jnp.allclose(out, ref, atol=1e-5, rtol=1e-5), "mismatch vs reference (small)"

    # --- tiny odd batch: exercises row padding (3 -> 8) on the latency path ---
    state_tiny = jax.random.normal(k_tiny, (3, state_size), dtype=jnp.float32)
    out_tiny = jax.block_until_ready(qnetwork_forward(state_tiny, params))
    ref_tiny = reference_forward(state_tiny, params)
    assert out_tiny.shape == (3, action_size)
    assert jnp.allclose(out_tiny, ref_tiny, atol=1e-5, rtol=1e-5), "mismatch vs reference (tiny)"

    # --- larger non-multiple batch: 2 grid steps of 504 rows (pads 1000 -> 1008) ---
    big_batch = 1000
    state_big = jax.random.normal(k_big, (big_batch, state_size), dtype=jnp.float32)
    out_big = jax.block_until_ready(qnetwork_forward(state_big, params))
    ref_big = reference_forward(state_big, params)
    assert out_big.shape == (big_batch, action_size)
    assert jnp.allclose(out_big, ref_big, atol=1e-5, rtol=1e-5), "mismatch vs reference (big)"

    print("KERNEL_OK")
</pallas_src>

<mosaic_0001>
module attributes {stable_mosaic.version = 11 : i64} {
  func.func @qnetwork_kernel(%arg0: i32, %arg1: memref<16x8xf32, #tpu.memory_space<vmem>>, %arg2: memref<8x64xf32, #tpu.memory_space<vmem>>, %arg3: memref<1x64xf32, #tpu.memory_space<vmem>>, %arg4: memref<64x64xf32, #tpu.memory_space<vmem>>, %arg5: memref<1x64xf32, #tpu.memory_space<vmem>>, %arg6: memref<64x4xf32, #tpu.memory_space<vmem>>, %arg7: memref<1x4xf32, #tpu.memory_space<vmem>>, %arg8: memref<16x4xf32, #tpu.memory_space<vmem>>) attributes {dimension_semantics = [#tpu.dimension_semantics<parallel>], iteration_bounds = array<i64: 1>, scalar_prefetch = 0 : i64, scratch_operands = 0 : i64, tpu.core_type = #tpu.core_type<tc>, window_params = [{transform_indices = @transform_0, window_bounds = array<i64: 16, 8>}, {pipeline_mode = #tpu.pipeline_mode<synchronous>, transform_indices = @transform_1, window_bounds = array<i64: 8, 64>}, {pipeline_mode = #tpu.pipeline_mode<synchronous>, transform_indices = @transform_2, window_bounds = array<i64: 1, 64>}, {pipeline_mode = #tpu.pipeline_mode<synchronous>, transform_indices = @transform_3, window_bounds = array<i64: 64, 64>}, {pipeline_mode = #tpu.pipeline_mode<synchronous>, transform_indices = @transform_4, window_bounds = array<i64: 1, 64>}, {pipeline_mode = #tpu.pipeline_mode<synchronous>, transform_indices = @transform_5, window_bounds = array<i64: 64, 4>}, {pipeline_mode = #tpu.pipeline_mode<synchronous>, transform_indices = @transform_6, window_bounds = array<i64: 1, 4>}, {transform_indices = @transform_7, window_bounds = array<i64: 16, 4>}]} {
    %c0 = arith.constant 0 : index
    %c0_0 = arith.constant 0 : index
    %0 = vector.load %arg1[%c0, %c0_0] : memref<16x8xf32, #tpu.memory_space<vmem>>, vector<16x8xf32>
    %c0_1 = arith.constant 0 : index
    %c0_2 = arith.constant 0 : index
    %1 = vector.load %arg2[%c0_1, %c0_2] : memref<8x64xf32, #tpu.memory_space<vmem>>, vector<8x64xf32>
    %cst = arith.constant dense<0.000000e+00> : vector<16x64xf32>
    %2 = tpu.matmul %0, %1, %cst {dimension_numbers = #tpu.dot_dimension_numbers<[1], [0], [0], [1], [0, 0, 1, 1], [], []>} : vector<16x8xf32>, vector<8x64xf32>, vector<16x64xf32> -> vector<16x64xf32>
    %c0_3 = arith.constant 0 : index
    %c0_4 = arith.constant 0 : index
    %3 = vector.load %arg3[%c0_3, %c0_4] : memref<1x64xf32, #tpu.memory_space<vmem>>, vector<1x64xf32>
    %4 = vector.broadcast %3 : vector<1x64xf32> to vector<16x64xf32>
    %5 = arith.addf %2, %4 : vector<16x64xf32>
    %cst_5 = arith.constant 0.000000e+00 : f32
    %6 = vector.broadcast %cst_5 : f32 to vector<16x64xf32>
    %7 = arith.maximumf %5, %6 : vector<16x64xf32>
    %c0_6 = arith.constant 0 : index
    %c0_7 = arith.constant 0 : index
    %8 = vector.load %arg4[%c0_6, %c0_7] : memref<64x64xf32, #tpu.memory_space<vmem>>, vector<64x64xf32>
    %cst_8 = arith.constant dense<0.000000e+00> : vector<16x64xf32>
    %9 = tpu.matmul %7, %8, %cst_8 {dimension_numbers = #tpu.dot_dimension_numbers<[1], [0], [0], [1], [0, 0, 1, 1], [], []>} : vector<16x64xf32>, vector<64x64xf32>, vector<16x64xf32> -> vector<16x64xf32>
    %c0_9 = arith.constant 0 : index
    %c0_10 = arith.constant 0 : index
    %10 = vector.load %arg5[%c0_9, %c0_10] : memref<1x64xf32, #tpu.memory_space<vmem>>, vector<1x64xf32>
    %11 = vector.broadcast %10 : vector<1x64xf32> to vector<16x64xf32>
    %12 = arith.addf %9, %11 : vector<16x64xf32>
    %cst_11 = arith.constant 0.000000e+00 : f32
    %13 = vector.broadcast %cst_11 : f32 to vector<16x64xf32>
    %14 = arith.maximumf %12, %13 : vector<16x64xf32>
    %c0_12 = arith.constant 0 : index
    %c0_13 = arith.constant 0 : index
    %15 = vector.load %arg6[%c0_12, %c0_13] : memref<64x4xf32, #tpu.memory_space<vmem>>, vector<64x4xf32>
    %cst_14 = arith.constant dense<0.000000e+00> : vector<16x4xf32>
    %16 = tpu.matmul %14, %15, %cst_14 {dimension_numbers = #tpu.dot_dimension_numbers<[1], [0], [0], [1], [0, 0, 1, 1], [], []>} : vector<16x64xf32>, vector<64x4xf32>, vector<16x4xf32> -> vector<16x4xf32>
    %c0_15 = arith.constant 0 : index
    %c0_16 = arith.constant 0 : index
    %17 = vector.load %arg7[%c0_15, %c0_16] : memref<1x4xf32, #tpu.memory_space<vmem>>, vector<1x4xf32>
    %18 = vector.broadcast %17 : vector<1x4xf32> to vector<16x4xf32>
    %19 = arith.addf %16, %18 : vector<16x4xf32>
    %cst_17 = arith.constant 0.000000e+00 : f32
    %20 = vector.broadcast %cst_17 : f32 to vector<16x4xf32>
    %21 = arith.maximumf %19, %20 : vector<16x4xf32>
    %c0_18 = arith.constant 0 : index
    %c0_19 = arith.constant 0 : index
    %22 = vector.load %arg8[%c0_18, %c0_19] : memref<16x4xf32, #tpu.memory_space<vmem>>, vector<16x4xf32>
    tpu.vector_store %arg8[%c0_18, %c0_19], %21 {strides = array<i32>} : memref<16x4xf32, #tpu.memory_space<vmem>>, vector<16x4xf32>,
    return
  }
  func.func @transform_0(%arg0: i32) -> (i32, i32) {
    %c0_i32 = arith.constant 0 : i32
    %c0_i32_0 = arith.constant 0 : i32
    return %arg0, %c0_i32 : i32, i32
  }
  func.func @transform_1(%arg0: i32) -> (i32, i32) {
    %c0_i32 = arith.constant 0 : i32
    %c0_i32_0 = arith.constant 0 : i32
    %c0_i32_1 = arith.constant 0 : i32
    return %c0_i32, %c0_i32_0 : i32, i32
  }
  func.func @transform_2(%arg0: i32) -> (i32, i32) {
    %c0_i32 = arith.constant 0 : i32
    %c0_i32_0 = arith.constant 0 : i32
    %c0_i32_1 = arith.constant 0 : i32
    return %c0_i32, %c0_i32_0 : i32, i32
  }
  func.func @transform_3(%arg0: i32) -> (i32, i32) {
    %c0_i32 = arith.constant 0 : i32
    %c0_i32_0 = arith.constant 0 : i32
    %c0_i32_1 = arith.constant 0 : i32
    return %c0_i32, %c0_i32_0 : i32, i32
  }
  func.func @transform_4(%arg0: i32) -> (i32, i32) {
    %c0_i32 = arith.constant 0 : i32
    %c0_i32_0 = arith.constant 0 : i32
    %c0_i32_1 = arith.constant 0 : i32
    return %c0_i32, %c0_i32_0 : i32, i32
  }
  func.func @transform_5(%arg0: i32) -> (i32, i32) {
    %c0_i32 = arith.constant 0 : i32
    %c0_i32_0 = arith.constant 0 : i32
    %c0_i32_1 = arith.constant 0 : i32
    return %c0_i32, %c0_i32_0 : i32, i32
  }
  func.func @transform_6(%arg0: i32) -> (i32, i32) {
    %c0_i32 = arith.constant 0 : i32
    %c0_i32_0 = arith.constant 0 : i32
    %c0_i32_1 = arith.constant 0 : i32
    return %c0_i32, %c0_i32_0 : i32, i32
  }
  func.func @transform_7(%arg0: i32) -> (i32, i32) {
    %c0_i32 = arith.constant 0 : i32
    %c0_i32_0 = arith.constant 0 : i32
    return %arg0, %c0_i32 : i32, i32
  }
}

module attributes {stable_mosaic.version = 11 : i64} {
  func.func @qnetwork_kernel(%arg0: i32, %arg1: memref<16x8xf32, #tpu.memory_space<vmem>>, %arg2: memref<8x64xf32, #tpu.memory_space<vmem>>, %arg3: memref<1x64xf32, #tpu.memory_space<vmem>>, %arg4: memref<64x64xf32, #tpu.memory_space<vmem>>, %arg5: memref<1x64xf32, #tpu.memory_space<vmem>>, %arg6: memref<64x4xf32, #tpu.memory_space<vmem>>, %arg7: memref<1x4xf32, #tpu.memory_space<vmem>>, %arg8: memref<16x4xf32, #tpu.memory_space<vmem>>) attributes {dimension_semantics = [#tpu.dimension_semantics<parallel>], iteration_bounds = array<i64: 1>, scalar_prefetch = 0 : i64, scratch_operands = 0 : i64, tpu.core_type = #tpu.core_type<tc>, window_params = [{transform_indices = @transform_0, window_bounds = array<i64: 16, 8>}, {pipeline_mode = #tpu.pipeline_mode<synchronous>, transform_indices = @transform_1, window_bounds = array<i64: 8, 64>}, {pipeline_mode = #tpu.pipeline_mode<synchronous>, transform_indices = @transform_2, window_bounds = array<i64: 1, 64>}, {pipeline_mode = #tpu.pipeline_mode<synchronous>, transform_indices = @transform_3, window_bounds = array<i64: 64, 64>}, {pipeline_mode = #tpu.pipeline_mode<synchronous>, transform_indices = @transform_4, window_bounds = array<i64: 1, 64>}, {pipeline_mode = #tpu.pipeline_mode<synchronous>, transform_indices = @transform_5, window_bounds = array<i64: 64, 4>}, {pipeline_mode = #tpu.pipeline_mode<synchronous>, transform_indices = @transform_6, window_bounds = array<i64: 1, 4>}, {transform_indices = @transform_7, window_bounds = array<i64: 16, 4>}]} {
    %c0 = arith.constant 0 : index
    %c0_0 = arith.constant 0 : index
    %0 = vector.load %arg1[%c0, %c0_0] : memref<16x8xf32, #tpu.memory_space<vmem>>, vector<16x8xf32>
    %c0_1 = arith.constant 0 : index
    %c0_2 = arith.constant 0 : index
    %1 = vector.load %arg2[%c0_1, %c0_2] : memref<8x64xf32, #tpu.memory_space<vmem>>, vector<8x64xf32>
    %cst = arith.constant dense<0.000000e+00> : vector<16x64xf32>
    %2 = tpu.matmul %0, %1, %cst {dimension_numbers = #tpu.dot_dimension_numbers<[1], [0], [0], [1], [0, 0, 1, 1], [], []>} : vector<16x8xf32>, vector<8x64xf32>, vector<16x64xf32> -> vector<16x64xf32>
    %c0_3 = arith.constant 0 : index
    %c0_4 = arith.constant 0 : index
    %3 = vector.load %arg3[%c0_3, %c0_4] : memref<1x64xf32, #tpu.memory_space<vmem>>, vector<1x64xf32>
    %4 = vector.broadcast %3 : vector<1x64xf32> to vector<16x64xf32>
    %5 = arith.addf %2, %4 : vector<16x64xf32>
    %cst_5 = arith.constant 0.000000e+00 : f32
    %6 = vector.broadcast %cst_5 : f32 to vector<16x64xf32>
    %7 = arith.maximumf %5, %6 : vector<16x64xf32>
    %c0_6 = arith.constant 0 : index
    %c0_7 = arith.constant 0 : index
    %8 = vector.load %arg4[%c0_6, %c0_7] : memref<64x64xf32, #tpu.memory_space<vmem>>, vector<64x64xf32>
    %cst_8 = arith.constant dense<0.000000e+00> : vector<16x64xf32>
    %9 = tpu.matmul %7, %8, %cst_8 {dimension_numbers = #tpu.dot_dimension_numbers<[1], [0], [0], [1], [0, 0, 1, 1], [], []>} : vector<16x64xf32>, vector<64x64xf32>, vector<16x64xf32> -> vector<16x64xf32>
    %c0_9 = arith.constant 0 : index
    %c0_10 = arith.constant 0 : index
    %10 = vector.load %arg5[%c0_9, %c0_10] : memref<1x64xf32, #tpu.memory_space<vmem>>, vector<1x64xf32>
    %11 = vector.broadcast %10 : vector<1x64xf32> to vector<16x64xf32>
    %12 = arith.addf %9, %11 : vector<16x64xf32>
    %cst_11 = arith.constant 0.000000e+00 : f32
    %13 = vector.broadcast %cst_11 : f32 to vector<16x64xf32>
    %14 = arith.maximumf %12, %13 : vector<16x64xf32>
    %c0_12 = arith.constant 0 : index
    %c0_13 = arith.constant 0 : index
    %15 = vector.load %arg6[%c0_12, %c0_13] : memref<64x4xf32, #tpu.memory_space<vmem>>, vector<64x4xf32>
    %cst_14 = arith.constant dense<0.000000e+00> : vector<16x4xf32>
    %16 = tpu.matmul %14, %15, %cst_14 {dimension_numbers = #tpu.dot_dimension_numbers<[1], [0], [0], [1], [0, 0, 1, 1], [], []>} : vector<16x64xf32>, vector<64x4xf32>, vector<16x4xf32> -> vector<16x4xf32>
    %c0_15 = arith.constant 0 : index
    %c0_16 = arith.constant 0 : index
    %17 = vector.load %arg7[%c0_15, %c0_16] : memref<1x4xf32, #tpu.memory_space<vmem>>, vector<1x4xf32>
    %18 = vector.broadcast %17 : vector<1x4xf32> to vector<16x4xf32>
    %19 = arith.addf %16, %18 : vector<16x4xf32>
    %cst_17 = arith.constant 0.000000e+00 : f32
    %20 = vector.broadcast %cst_17 : f32 to vector<16x4xf32>
    %21 = arith.maximumf %19, %20 : vector<16x4xf32>
    %c0_18 = arith.constant 0 : index
    %c0_19 = arith.constant 0 : index
    %22 = vector.load %arg8[%c0_18, %c0_19] : memref<16x4xf32, #tpu.memory_space<vmem>>, vector<16x4xf32>
    tpu.vector_store %arg8[%c0_18, %c0_19], %21 {strides = array<i32>} : memref<16x4xf32, #tpu.memory_space<vmem>>, vector<16x4xf32>,
    return
  }
  func.func @transform_0(%arg0: i32) -> (i32, i32) {
    %c0_i32 = arith.constant 0 : i32
    %c0_i32_0 = arith.constant 0 : i32
    return %arg0, %c0_i32 : i32, i32
  }
  func.func @transform_1(%arg0: i32) -> (i32, i32) {
    %c0_i32 = arith.constant 0 : i32
    %c0_i32_0 = arith.constant 0 : i32
    %c0_i32_1 = arith.constant 0 : i32
    return %c0_i32, %c0_i32_0 : i32, i32
  }
  func.func @transform_2(%arg0: i32) -> (i32, i32) {
    %c0_i32 = arith.constant 0 : i32
    %c0_i32_0 = arith.constant 0 : i32
    %c0_i32_1 = arith.constant 0 : i32
    return %c0_i32, %c0_i32_0 : i32, i32
  }
  func.func @transform_3(%arg0: i32) -> (i32, i32) {
    %c0_i32 = arith.constant 0 : i32
    %c0_i32_0 = arith.constant 0 : i32
    %c0_i32_1 = arith.constant 0 : i32
    return %c0_i32, %c0_i32_0 : i32, i32
  }
  func.func @transform_4(%arg0: i32) -> (i32, i32) {
    %c0_i32 = arith.constant 0 : i32
    %c0_i32_0 = arith.constant 0 : i32
    %c0_i32_1 = arith.constant 0 : i32
    return %c0_i32, %c0_i32_0 : i32, i32
  }
  func.func @transform_5(%arg0: i32) -> (i32, i32) {
    %c0_i32 = arith.constant 0 : i32
    %c0_i32_0 = arith.constant 0 : i32
    %c0_i32_1 = arith.constant 0 : i32
    return %c0_i32, %c0_i32_0 : i32, i32
  }
  func.func @transform_6(%arg0: i32) -> (i32, i32) {
    %c0_i32 = arith.constant 0 : i32
    %c0_i32_0 = arith.constant 0 : i32
    %c0_i32_1 = arith.constant 0 : i32
    return %c0_i32, %c0_i32_0 : i32, i32
  }
  func.func @transform_7(%arg0: i32) -> (i32, i32) {
    %c0_i32 = arith.constant 0 : i32
    %c0_i32_0 = arith.constant 0 : i32
    return %arg0, %c0_i32 : i32, i32
  }
}

</mosaic_0001>

<llo_original>
// kernel: tpu_custom_call.1
$region0: #{tpu_custom_call.1}
  #allocation0 [shape = 'u32[]', space=smem, size = 0x4, offset = 0x4, fixed_abs, tag = 'smem constant byte address 0x4 - core index']
  #allocation1 [shape = 'u32[144,128]{1,0:T(1,128)}', space=vmem, size = 0x12000, scoped, tag = 'internal scratch']
  %s0 = inlined_call_operand.vmem [shape: f32[16,8], index: 0, kind: input, shape index: {}]
  %s1 = inlined_call_operand.vmem [shape: f32[8,64], index: 1, kind: input, shape index: {}]
  %s2 = inlined_call_operand.vmem [shape: f32[1,64], index: 2, kind: input, shape index: {}]
  %s3 = inlined_call_operand.vmem [shape: f32[64,64], index: 3, kind: input, shape index: {}]
  %s4 = inlined_call_operand.vmem [shape: f32[1,64], index: 4, kind: input, shape index: {}]
  %s5 = inlined_call_operand.vmem [shape: f32[64,4], index: 5, kind: input, shape index: {}]
  %s6 = inlined_call_operand.vmem [shape: f32[1,4], index: 6, kind: input, shape index: {}]
  %s7 = inlined_call_operand.vmem [shape: f32[16,4], index: 7, kind: output, shape index: {}]
  %s8 = sld [smem:[#allocation0]]
  $region38: #{tpu_custom_call.1} parent=0
    _
  %s10 = ssub.s32 1, %s8
  %s11 = scalar_select 0, %s10, %s8
  // Predicated region
  $region2: #{tpu_custom_call.1} parent=0 // pred_check
    _
  $region3: #{tpu_custom_call.1} parent=0 // pred_check_branch
    %13 = sbr.rel (0) target = $region5
  $region4: #{tpu_custom_call.1} parent=0 // pred_region
    _
  $region5: #{tpu_custom_call.1} parent=0 // pred_fallthru
    _
  // Predicated region
  $region6: #{tpu_custom_call.1} parent=0 // pred_check
    _
  $region7: #{tpu_custom_call.1} parent=0 // pred_check_branch
    %15 = sbr.rel (0) target = $region9
  $region8: #{tpu_custom_call.1} parent=0 // pred_region
    _
  $region9: #{tpu_custom_call.1} parent=0 // pred_fallthru
    _
  // Predicated region
  $region10: #{tpu_custom_call.1} parent=0 // pred_check
    _
  $region11: #{tpu_custom_call.1} parent=0 // pred_check_branch
    %17 = sbr.rel (0) target = $region13
  $region12: #{tpu_custom_call.1} parent=0 // pred_region
    _
  $region13: #{tpu_custom_call.1} parent=0 // pred_fallthru
    _
  // Predicated region
  $region14: #{tpu_custom_call.1} parent=0 // pred_check
    _
  $region15: #{tpu_custom_call.1} parent=0 // pred_check_branch
    %19 = sbr.rel (0) target = $region17
  $region16: #{tpu_custom_call.1} parent=0 // pred_region
    _
  $region17: #{tpu_custom_call.1} parent=0 // pred_fallthru
    _
  // Predicated region
  $region18: #{tpu_custom_call.1} parent=0 // pred_check
    _
  $region19: #{tpu_custom_call.1} parent=0 // pred_check_branch
    %21 = sbr.rel (0) target = $region21
  $region20: #{tpu_custom_call.1} parent=0 // pred_region
    _
  $region21: #{tpu_custom_call.1} parent=0 // pred_fallthru
    _
  // Predicated region
  $region22: #{tpu_custom_call.1} parent=0 // pred_check
    _
  $region23: #{tpu_custom_call.1} parent=0 // pred_check_branch
    %23 = sbr.rel (0) target = $region25
  $region24: #{tpu_custom_call.1} parent=0 // pred_region
    _
  $region25: #{tpu_custom_call.1} parent=0 // pred_fallthru
    _
  // Predicated region
  $region26: #{tpu_custom_call.1} parent=0 // pred_check
    _
  $region27: #{tpu_custom_call.1} parent=0 // pred_check_branch
    %25 = sbr.rel (0) target = $region29
  $region28: #{tpu_custom_call.1} parent=0 // pred_region
    _
  $region29: #{tpu_custom_call.1} parent=0 // pred_fallthru
    _
  %v26 = vld [vmem:[%s0] sm:$0xff]
  %v27 = vld [vmem:[%s0 + $0x8] sm:$0xff]
  %v28 = vld [vmem:[%s1] sm:$0xff]
  %v29 = vld [vmem:[%s2] sm:$0x1]
  %v31 = vlaneseq
  %v32 = vshrl.u32 %v31, 7
  %v33 = vsub.s32 0, %v32
  %v34 = vrot.slane %v29, %v33
  %vm36 = vcmask 64512
  %v38 = vsel %vm36, %v26, 0
  %v41 = vsel %vm36, %v27, 0
  %43 = vmatprep.subr.mxu0 0.0
  %44 = vmatpush1.msra.mxu0 0.0
  %45 = vmatprep.subr.mxu0 0.0
  %46 = vmatpush1.msra.mxu0 0.0
  %47 = vmatprep.subr.mxu0 0.0
  %48 = vmatpush1.msra.mxu0 0.0
  %49 = vmatprep.subr.mxu0 0.0
  %50 = vmatpush1.msra.mxu0 0.0
  %51 = vmatprep.subr.mxu0 0.0
  %52 = vmatpush1.msra.mxu0 0.0
  %53 = vmatprep.subr.mxu0 0.0
  %54 = vmatpush1.msra.mxu0 0.0
  %55 = vmatprep.subr.mxu0 0.0
  %56 = vmatpush1.msra.mxu0 0.0
  %57 = vmatprep.subr.mxu0 0.0
  %58 = vmatpush1.msra.mxu0 0.0
  %59 = vmatprep.subr.mxu0 0.0
  %60 = vmatpush1.msra.mxu0 0.0
  %61 = vmatprep.subr.mxu0 0.0
  %62 = vmatpush1.msra.mxu0 0.0
  %63 = vmatprep.subr.mxu0 0.0
  %64 = vmatpush1.msra.mxu0 0.0
  %65 = vmatprep.subr.mxu0 0.0
  %66 = vmatpush1.msra.mxu0 0.0
  %67 = vmatprep.subr.mxu0 0.0
  %68 = vmatpush1.msra.mxu0 0.0
  %69 = vmatprep.subr.mxu0 0.0
  %70 = vmatpush1.msra.mxu0 0.0
  %71 = vmatprep.subr.mxu0 0.0
  %72 = vmatpush1.msra.mxu0 0.0
  %73 = vmatprep.subr.mxu0 0.0
  %74 = vmatpush1.msra.mxu0 %v28
  %75 = vmatprep.subr.mxu0 0.0
  %76 = vmatpush2.msra.mxu0 0.0
  %77 = vmatprep.subr.mxu0 0.0
  %78 = vmatpush2.msra.mxu0 0.0
  %79 = vmatprep.subr.mxu0 0.0
  %80 = vmatpush2.msra.mxu0 0.0
  %81 = vmatprep.subr.mxu0 0.0
  %82 = vmatpush2.msra.mxu0 0.0
  %83 = vmatprep.subr.mxu0 0.0
  %84 = vmatpush2.msra.mxu0 0.0
  %85 = vmatprep.subr.mxu0 0.0
  %86 = vmatpush2.msra.mxu0 0.0
  %87 = vmatprep.subr.mxu0 0.0
  %88 = vmatpush2.msra.mxu0 0.0
  %89 = vmatprep.subr.mxu0 0.0
  %90 = vmatpush2.msra.mxu0 0.0
  %91 = vmatprep.subr.mxu0 0.0
  %92 = vmatpush2.msra.mxu0 0.0
  %93 = vmatprep.subr.mxu0 0.0
  %94 = vmatpush2.msra.mxu0 0.0
  %95 = vmatprep.subr.mxu0 0.0
  %96 = vmatpush2.msra.mxu0 0.0
  %97 = vmatprep.subr.mxu0 0.0
  %98 = vmatpush2.msra.mxu0 0.0
  %99 = vmatprep.subr.mxu0 0.0
  %100 = vmatpush2.msra.mxu0 0.0
  %101 = vmatprep.subr.mxu0 0.0
  %102 = vmatpush2.msra.mxu0 0.0
  %103 = vmatprep.subr.mxu0 0.0
  %104 = vmatpush2.msra.mxu0 0.0
  %105 = vmatprep.subr.mxu0 0.0
  %106 = vmatpush2.msra.mxu0 0.0
  %107 = vmatprep.mubr.f32.mxu0 0.0
  %108 = vmatmul.mubr.f32.gmra.mxu0 %v38
  %v109 = vpop.f32.mrf.mxu0
  %v110 = vadd.f32 %v34, %v109
  %v111 = vpop.f32.mrf.mxu0
  %112 = vmatprep.mubr.f32.mxu0 0.0
  %113 = vmatmul.mubr.f32.gmra.mxu0 %v41
  %v114 = vpop.f32.mrf.mxu0
  %v115 = vadd.f32 %v34, %v114
  %v116 = vpop.f32.mrf.mxu0
  %117 = vdwg.mxu0
  %v118 = vmax.f32 %v110, 0.0
  %v119 = vmax.f32 %v115, 0.0
  %v120 = vld [vmem:[%s3] sm:$0xff]
  %v121 = vld [vmem:[%s3 + $0x8] sm:$0xff]
  %v122 = vld [vmem:[%s3 + $0x10] sm:$0xff]
  %v123 = vld [vmem:[%s3 + $0x18] sm:$0xff]
  %v124 = vld [vmem:[%s3 + $0x20] sm:$0xff]
  %v125 = vld [vmem:[%s3 + $0x28] sm:$0xff]
  %v126 = vld [vmem:[%s3 + $0x30] sm:$0xff]
  %v127 = vld [vmem:[%s3 + $0x38] sm:$0xff]
  %v128 = vld [vmem:[%s4] sm:$0x1]
  %v130 = vlaneseq
  %v131 = vshrl.u32 %v130, 7
  %v132 = vsub.s32 0, %v131
  %v133 = vrot.slane %v128, %v132
  %vm135 = vcmask 523264
  %v137 = vsel %vm135, %v118, 0
  %v140 = vsel %vm135, %v119, 0
  %142 = vmatprep.subr.mxu0 0.0
  %143 = vmatpush1.msra.mxu0 0.0
  %144 = vmatprep.subr.mxu0 0.0
  %145 = vmatpush1.msra.mxu0 0.0
  %146 = vmatprep.subr.mxu0 0.0
  %147 = vmatpush1.msra.mxu0 0.0
  %148 = vmatprep.subr.mxu0 0.0
  %149 = vmatpush1.msra.mxu0 0.0
  %150 = vmatprep.subr.mxu0 0.0
  %151 = vmatpush1.msra.mxu0 0.0
  %152 = vmatprep.subr.mxu0 0.0
  %153 = vmatpush1.msra.mxu0 0.0
  %154 = vmatprep.subr.mxu0 0.0
  %155 = vmatpush1.msra.mxu0 0.0
  %156 = vmatprep.subr.mxu0 0.0
  %157 = vmatpush1.msra.mxu0 0.0
  %158 = vmatprep.subr.mxu0 0.0
  %159 = vmatpush1.msra.mxu0 %v127
  %160 = vmatprep.subr.mxu0 0.0
  %161 = vmatpush1.msra.mxu0 %v126
  %162 = vmatprep.subr.mxu0 0.0
  %163 = vmatpush1.msra.mxu0 %v125
  %164 = vmatprep.subr.mxu0 0.0
  %165 = vmatpush1.msra.mxu0 %v124
  %166 = vmatprep.subr.mxu0 0.0
  %167 = vmatpush1.msra.mxu0 %v123
  %168 = vmatprep.subr.mxu0 0.0
  %169 = vmatpush1.msra.mxu0 %v122
  %170 = vmatprep.subr.mxu0 0.0
  %171 = vmatpush1.msra.mxu0 %v121
  %172 = vmatprep.subr.mxu0 0.0
  %173 = vmatpush1.msra.mxu0 %v120
  %174 = vmatprep.subr.mxu0 0.0
  %175 = vmatpush2.msra.mxu0 0.0
  %176 = vmatprep.subr.mxu0 0.0
  %177 = vmatpush2.msra.mxu0 0.0
  %178 = vmatprep.subr.mxu0 0.0
  %179 = vmatpush2.msra.mxu0 0.0
  %180 = vmatprep.subr.mxu0 0.0
  %181 = vmatpush2.msra.mxu0 0.0
  %182 = vmatprep.subr.mxu0 0.0
  %183 = vmatpush2.msra.mxu0 0.0
  %184 = vmatprep.subr.mxu0 0.0
  %185 = vmatpush2.msra.mxu0 0.0
  %186 = vmatprep.subr.mxu0 0.0
  %187 = vmatpush2.msra.mxu0 0.0
  %188 = vmatprep.subr.mxu0 0.0
  %189 = vmatpush2.msra.mxu0 0.0
  %190 = vmatprep.subr.mxu0 0.0
  %191 = vmatpush2.msra.mxu0 0.0
  %192 = vmatprep.subr.mxu0 0.0
  %193 = vmatpush2.msra.mxu0 0.0
  %194 = vmatprep.subr.mxu0 0.0
  %195 = vmatpush2.msra.mxu0 0.0
  %196 = vmatprep.subr.mxu0 0.0
  %197 = vmatpush2.msra.mxu0 0.0
  %198 = vmatprep.subr.mxu0 0.0
  %199 = vmatpush2.msra.mxu0 0.0
  %200 = vmatprep.subr.mxu0 0.0
  %201 = vmatpush2.msra.mxu0 0.0
  %202 = vmatprep.subr.mxu0 0.0
  %203 = vmatpush2.msra.mxu0 0.0
  %204 = vmatprep.subr.mxu0 0.0
  %205 = vmatpush2.msra.mxu0 0.0
  %206 = vmatprep.mubr.f32.mxu0 0.0
  %207 = vmatmul.mubr.f32.gmra.mxu0 %v137
  %v208 = vpop.f32.mrf.mxu0
  %v209 = vadd.f32 %v133, %v208
  %v210 = vpop.f32.mrf.mxu0
  %211 = vmatprep.mubr.f32.mxu0 0.0
  %212 = vmatmul.mubr.f32.gmra.mxu0 %v140
  %v213 = vpop.f32.mrf.mxu0
  %v214 = vadd.f32 %v133, %v213
  %v215 = vpop.f32.mrf.mxu0
  %216 = vdwg.mxu0
  %v217 = vmax.f32 %v209, 0.0
  %v218 = vmax.f32 %v214, 0.0
  %v219 = vld [vmem:[%s5] sm:$0xff]
  %v220 = vld [vmem:[%s5 + $0x8] sm:$0xff]
  %v221 = vld [vmem:[%s5 + $0x10] sm:$0xff]
  %v222 = vld [vmem:[%s5 + $0x18] sm:$0xff]
  %v223 = vld [vmem:[%s5 + $0x20] sm:$0xff]
  %v224 = vld [vmem:[%s5 + $0x28] sm:$0xff]
  %v225 = vld [vmem:[%s5 + $0x30] sm:$0xff]
  %v226 = vld [vmem:[%s5 + $0x38] sm:$0xff]
  %v227 = vld [vmem:[%s6] sm:$0x1]
  %v229 = vlaneseq
  %v230 = vshrl.u32 %v229, 7
  %v231 = vsub.s32 0, %v230
  %v232 = vrot.slane %v227, %v231
  %v235 = vsel %vm135, %v217, 0
  %v238 = vsel %vm135, %v218, 0
  %240 = vmatprep.subr.mxu0 0.0
  %241 = vmatpush1.msra.mxu0 0.0
  %242 = vmatprep.subr.mxu0 0.0
  %243 = vmatpush1.msra.mxu0 0.0
  %244 = vmatprep.subr.mxu0 0.0
  %245 = vmatpush1.msra.mxu0 0.0
  %246 = vmatprep.subr.mxu0 0.0
  %247 = vmatpush1.msra.mxu0 0.0
  %248 = vmatprep.subr.mxu0 0.0
  %249 = vmatpush1.msra.mxu0 0.0
  %250 = vmatprep.subr.mxu0 0.0
  %251 = vmatpush1.msra.mxu0 0.0
  %252 = vmatprep.subr.mxu0 0.0
  %253 = vmatpush1.msra.mxu0 0.0
  %254 = vmatprep.subr.mxu0 0.0
  %255 = vmatpush1.msra.mxu0 0.0
  %256 = vmatprep.subr.mxu0 0.0
  %257 = vmatpush1.msra.mxu0 %v226
  %258 = vmatprep.subr.mxu0 0.0
  %259 = vmatpush1.msra.mxu0 %v225
  %260 = vmatprep.subr.mxu0 0.0
  %261 = vmatpush1.msra.mxu0 %v224
  %262 = vmatprep.subr.mxu0 0.0
  %263 = vmatpush1.msra.mxu0 %v223
  %264 = vmatprep.subr.mxu0 0.0
  %265 = vmatpush1.msra.mxu0 %v222
  %266 = vmatprep.subr.mxu0 0.0
  %267 = vmatpush1.msra.mxu0 %v221
  %268 = vmatprep.subr.mxu0 0.0
  %269 = vmatpush1.msra.mxu0 %v220
  %270 = vmatprep.subr.mxu0 0.0
  %271 = vmatpush1.msra.mxu0 %v219
  %272 = vmatprep.subr.mxu0 0.0
  %273 = vmatpush2.msra.mxu0 0.0
  %274 = vmatprep.subr.mxu0 0.0
  %275 = vmatpush2.msra.mxu0 0.0
  %276 = vmatprep.subr.mxu0 0.0
  %277 = vmatpush2.msra.mxu0 0.0
  %278 = vmatprep.subr.mxu0 0.0
  %279 = vmatpush2.msra.mxu0 0.0
  %280 = vmatprep.subr.mxu0 0.0
  %281 = vmatpush2.msra.mxu0 0.0
  %282 = vmatprep.subr.mxu0 0.0
  %283 = vmatpush2.msra.mxu0 0.0
  %284 = vmatprep.subr.mxu0 0.0
  %285 = vmatpush2.msra.mxu0 0.0
  %286 = vmatprep.subr.mxu0 0.0
  %287 = vmatpush2.msra.mxu0 0.0
  %288 = vmatprep.subr.mxu0 0.0
  %289 = vmatpush2.msra.mxu0 0.0
  %290 = vmatprep.subr.mxu0 0.0
  %291 = vmatpush2.msra.mxu0 0.0
  %292 = vmatprep.subr.mxu0 0.0
  %293 = vmatpush2.msra.mxu0 0.0
  %294 = vmatprep.subr.mxu0 0.0
  %295 = vmatpush2.msra.mxu0 0.0
  %296 = vmatprep.subr.mxu0 0.0
  %297 = vmatpush2.msra.mxu0 0.0
  %298 = vmatprep.subr.mxu0 0.0
  %299 = vmatpush2.msra.mxu0 0.0
  %300 = vmatprep.subr.mxu0 0.0
  %301 = vmatpush2.msra.mxu0 0.0
  %302 = vmatprep.subr.mxu0 0.0
  %303 = vmatpush2.msra.mxu0 0.0
  %304 = vmatprep.mubr.f32.mxu0 0.0
  %305 = vmatmul.mubr.f32.gmra.mxu0 %v235
  %v306 = vpop.f32.mrf.mxu0
  %v307 = vadd.f32 %v232, %v306
  %v308 = vpop.f32.mrf.mxu0
  %309 = vmatprep.mubr.f32.mxu0 0.0
  %310 = vmatmul.mubr.f32.gmra.mxu0 %v238
  %v311 = vpop.f32.mrf.mxu0
  %v312 = vadd.f32 %v232, %v311
  %v313 = vpop.f32.mrf.mxu0
  %314 = vdwg.mxu0
  %v315 = vmax.f32 %v307, 0.0
  %v316 = vmax.f32 %v312, 0.0
  %vm317 = vcmask 31744
  %318 = vst.msk [vmem:[%s7] sm:$0xff] %vm317, %v315
  %319 = vst.msk [vmem:[%s7 + $0x8] sm:$0xff] %vm317, %v316
  // Predicated region
  $region30: #{tpu_custom_call.1} parent=0 // pred_check
    _
  $region31: #{tpu_custom_call.1} parent=0 // pred_check_branch
    %321 = sbr.rel (0) target = $region33
  $region32: #{tpu_custom_call.1} parent=0 // pred_region
    _
  $region33: #{tpu_custom_call.1} parent=0 // pred_fallthru
    _
  // Predicated region
  $region34: #{tpu_custom_call.1} parent=0 // pred_check
    _
  $region35: #{tpu_custom_call.1} parent=0 // pred_check_branch
    %323 = sbr.rel (0) target = $region37
  $region36: #{tpu_custom_call.1} parent=0 // pred_region
    _
  $region37: #{tpu_custom_call.1} parent=0 // pred_fallthru
    _

// kernel: tpu_custom_call.1
$region0: #{tpu_custom_call.1}
  #allocation0 [shape = 'u32[]', space=smem, size = 0x4, offset = 0x4, fixed_abs, tag = 'smem constant byte address 0x4 - core index']
  #allocation1 [shape = 'u32[144,128]{1,0:T(1,128)}', space=vmem, size = 0x12000, scoped, tag = 'internal scratch']
  %s0 = inlined_call_operand.vmem [shape: f32[16,8], index: 0, kind: input, shape index: {}]
  %s1 = inlined_call_operand.vmem [shape: f32[8,64], index: 1, kind: input, shape index: {}]
  %s2 = inlined_call_operand.vmem [shape: f32[1,64], index: 2, kind: input, shape index: {}]
  %s3 = inlined_call_operand.vmem [shape: f32[64,64], index: 3, kind: input, shape index: {}]
  %s4 = inlined_call_operand.vmem [shape: f32[1,64], index: 4, kind: input, shape index: {}]
  %s5 = inlined_call_operand.vmem [shape: f32[64,4], index: 5, kind: input, shape index: {}]
  %s6 = inlined_call_operand.vmem [shape: f32[1,4], index: 6, kind: input, shape index: {}]
  %s7 = inlined_call_operand.vmem [shape: f32[16,4], index: 7, kind: output, shape index: {}]
  %s8 = sld [smem:[#allocation0]]
  $region38: #{tpu_custom_call.1} parent=0
    _
  %s10 = ssub.s32 1, %s8
  %s11 = scalar_select 0, %s10, %s8
  // Predicated region
  $region2: #{tpu_custom_call.1} parent=0 // pred_check
    _
  $region3: #{tpu_custom_call.1} parent=0 // pred_check_branch
    %13 = sbr.rel (0) target = $region5
  $region4: #{tpu_custom_call.1} parent=0 // pred_region
    _
  $region5: #{tpu_custom_call.1} parent=0 // pred_fallthru
    _
  // Predicated region
  $region6: #{tpu_custom_call.1} parent=0 // pred_check
    _
  $region7: #{tpu_custom_call.1} parent=0 // pred_check_branch
    %15 = sbr.rel (0) target = $region9
  $region8: #{tpu_custom_call.1} parent=0 // pred_region
    _
  $region9: #{tpu_custom_call.1} parent=0 // pred_fallthru
    _
  // Predicated region
  $region10: #{tpu_custom_call.1} parent=0 // pred_check
    _
  $region11: #{tpu_custom_call.1} parent=0 // pred_check_branch
    %17 = sbr.rel (0) target = $region13
  $region12: #{tpu_custom_call.1} parent=0 // pred_region
    _
  $region13: #{tpu_custom_call.1} parent=0 // pred_fallthru
    _
  // Predicated region
  $region14: #{tpu_custom_call.1} parent=0 // pred_check
    _
  $region15: #{tpu_custom_call.1} parent=0 // pred_check_branch
    %19 = sbr.rel (0) target = $region17
  $region16: #{tpu_custom_call.1} parent=0 // pred_region
    _
  $region17: #{tpu_custom_call.1} parent=0 // pred_fallthru
    _
  // Predicated region
  $region18: #{tpu_custom_call.1} parent=0 // pred_check
    _
  $region19: #{tpu_custom_call.1} parent=0 // pred_check_branch
    %21 = sbr.rel (0) target = $region21
  $region20: #{tpu_custom_call.1} parent=0 // pred_region
    _
  $region21: #{tpu_custom_call.1} parent=0 // pred_fallthru
    _
  // Predicated region
  $region22: #{tpu_custom_call.1} parent=0 // pred_check
    _
  $region23: #{tpu_custom_call.1} parent=0 // pred_check_branch
    %23 = sbr.rel (0) target = $region25
  $region24: #{tpu_custom_call.1} parent=0 // pred_region
    _
  $region25: #{tpu_custom_call.1} parent=0 // pred_fallthru
    _
  // Predicated region
  $region26: #{tpu_custom_call.1} parent=0 // pred_check
    _
  $region27: #{tpu_custom_call.1} parent=0 // pred_check_branch
    %25 = sbr.rel (0) target = $region29
  $region28: #{tpu_custom_call.1} parent=0 // pred_region
    _
  $region29: #{tpu_custom_call.1} parent=0 // pred_fallthru
    _
  %v26 = vld [vmem:[%s0] sm:$0xff]
  %v27 = vld [vmem:[%s0 + $0x8] sm:$0xff]
  %v28 = vld [vmem:[%s1] sm:$0xff]
  %v29 = vld [vmem:[%s2] sm:$0x1]
  %v31 = vlaneseq
  %v32 = vshrl.u32 %v31, 7
  %v33 = vsub.s32 0, %v32
  %v34 = vrot.slane %v29, %v33
  %vm36 = vcmask 64512
  %v38 = vsel %vm36, %v26, 0
  %v41 = vsel %vm36, %v27, 0
  %43 = vmatprep.subr.mxu0 0.0
  %44 = vmatpush1.msra.mxu0 0.0
  %45 = vmatprep.subr.mxu0 0.0
  %46 = vmatpush1.msra.mxu0 0.0
  %47 = vmatprep.subr.mxu0 0.0
  %48 = vmatpush1.msra.mxu0 0.0
  %49 = vmatprep.subr.mxu0 0.0
  %50 = vmatpush1.msra.mxu0 0.0
  %51 = vmatprep.subr.mxu0 0.0
  %52 = vmatpush1.msra.mxu0 0.0
  %53 = vmatprep.subr.mxu0 0.0
  %54 = vmatpush1.msra.mxu0 0.0
  %55 = vmatprep.subr.mxu0 0.0
  %56 = vmatpush1.msra.mxu0 0.0
  %57 = vmatprep.subr.mxu0 0.0
  %58 = vmatpush1.msra.mxu0 0.0
  %59 = vmatprep.subr.mxu0 0.0
  %60 = vmatpush1.msra.mxu0 0.0
  %61 = vmatprep.subr.mxu0 0.0
  %62 = vmatpush1.msra.mxu0 0.0
  %63 = vmatprep.subr.mxu0 0.0
  %64 = vmatpush1.msra.mxu0 0.0
  %65 = vmatprep.subr.mxu0 0.0
  %66 = vmatpush1.msra.mxu0 0.0
  %67 = vmatprep.subr.mxu0 0.0
  %68 = vmatpush1.msra.mxu0 0.0
  %69 = vmatprep.subr.mxu0 0.0
  %70 = vmatpush1.msra.mxu0 0.0
  %71 = vmatprep.subr.mxu0 0.0
  %72 = vmatpush1.msra.mxu0 0.0
  %73 = vmatprep.subr.mxu0 0.0
  %74 = vmatpush1.msra.mxu0 %v28
  %75 = vmatprep.subr.mxu0 0.0
  %76 = vmatpush2.msra.mxu0 0.0
  %77 = vmatprep.subr.mxu0 0.0
  %78 = vmatpush2.msra.mxu0 0.0
  %79 = vmatprep.subr.mxu0 0.0
  %80 = vmatpush2.msra.mxu0 0.0
  %81 = vmatprep.subr.mxu0 0.0
  %82 = vmatpush2.msra.mxu0 0.0
  %83 = vmatprep.subr.mxu0 0.0
  %84 = vmatpush2.msra.mxu0 0.0
  %85 = vmatprep.subr.mxu0 0.0
  %86 = vmatpush2.msra.mxu0 0.0
  %87 = vmatprep.subr.mxu0 0.0
  %88 = vmatpush2.msra.mxu0 0.0
  %89 = vmatprep.subr.mxu0 0.0
  %90 = vmatpush2.msra.mxu0 0.0
  %91 = vmatprep.subr.mxu0 0.0
  %92 = vmatpush2.msra.mxu0 0.0
  %93 = vmatprep.subr.mxu0 0.0
  %94 = vmatpush2.msra.mxu0 0.0
  %95 = vmatprep.subr.mxu0 0.0
  %96 = vmatpush2.msra.mxu0 0.0
  %97 = vmatprep.subr.mxu0 0.0
  %98 = vmatpush2.msra.mxu0 0.0
  %99 = vmatprep.subr.mxu0 0.0
  %100 = vmatpush2.msra.mxu0 0.0
  %101 = vmatprep.subr.mxu0 0.0
  %102 = vmatpush2.msra.mxu0 0.0
  %103 = vmatprep.subr.mxu0 0.0
  %104 = vmatpush2.msra.mxu0 0.0
  %105 = vmatprep.subr.mxu0 0.0
  %106 = vmatpush2.msra.mxu0 0.0
  %107 = vmatprep.mubr.f32.mxu0 0.0
  %108 = vmatmul.mubr.f32.gmra.mxu0 %v38
  %v109 = vpop.f32.mrf.mxu0
  %v110 = vadd.f32 %v34, %v109
  %v111 = vpop.f32.mrf.mxu0
  %112 = vmatprep.mubr.f32.mxu0 0.0
  %113 = vmatmul.mubr.f32.gmra.mxu0 %v41
  %v114 = vpop.f32.mrf.mxu0
  %v115 = vadd.f32 %v34, %v114
  %v116 = vpop.f32.mrf.mxu0
  %117 = vdwg.mxu0
  %v118 = vmax.f32 %v110, 0.0
  %v119 = vmax.f32 %v115, 0.0
  %v120 = vld [vmem:[%s3] sm:$0xff]
  %v121 = vld [vmem:[%s3 + $0x8] sm:$0xff]
  %v122 = vld [vmem:[%s3 + $0x10] sm:$0xff]
  %v123 = vld [vmem:[%s3 + $0x18] sm:$0xff]
  %v124 = vld [vmem:[%s3 + $0x20] sm:$0xff]
  %v125 = vld [vmem:[%s3 + $0x28] sm:$0xff]
  %v126 = vld [vmem:[%s3 + $0x30] sm:$0xff]
  %v127 = vld [vmem:[%s3 + $0x38] sm:$0xff]
  %v128 = vld [vmem:[%s4] sm:$0x1]
  %v130 = vlaneseq
  %v131 = vshrl.u32 %v130, 7
  %v132 = vsub.s32 0, %v131
  %v133 = vrot.slane %v128, %v132
  %vm135 = vcmask 523264
  %v137 = vsel %vm135, %v118, 0
  %v140 = vsel %vm135, %v119, 0
  %142 = vmatprep.subr.mxu0 0.0
  %143 = vmatpush1.msra.mxu0 0.0
  %144 = vmatprep.subr.mxu0 0.0
  %145 = vmatpush1.msra.mxu0 0.0
  %146 = vmatprep.subr.mxu0 0.0
  %147 = vmatpush1.msra.mxu0 0.0
  %148 = vmatprep.subr.mxu0 0.0
  %149 = vmatpush1.msra.mxu0 0.0
  %150 = vmatprep.subr.mxu0 0.0
  %151 = vmatpush1.msra.mxu0 0.0
  %152 = vmatprep.subr.mxu0 0.0
  %153 = vmatpush1.msra.mxu0 0.0
  %154 = vmatprep.subr.mxu0 0.0
  %155 = vmatpush1.msra.mxu0 0.0
  %156 = vmatprep.subr.mxu0 0.0
  %157 = vmatpush1.msra.mxu0 0.0
  %158 = vmatprep.subr.mxu0 0.0
  %159 = vmatpush1.msra.mxu0 %v127
  %160 = vmatprep.subr.mxu0 0.0
  %161 = vmatpush1.msra.mxu0 %v126
  %162 = vmatprep.subr.mxu0 0.0
  %163 = vmatpush1.msra.mxu0 %v125
  %164 = vmatprep.subr.mxu0 0.0
  %165 = vmatpush1.msra.mxu0 %v124
  %166 = vmatprep.subr.mxu0 0.0
  %167 = vmatpush1.msra.mxu0 %v123
  %168 = vmatprep.subr.mxu0 0.0
  %169 = vmatpush1.msra.mxu0 %v122
  %170 = vmatprep.subr.mxu0 0.0
  %171 = vmatpush1.msra.mxu0 %v121
  %172 = vmatprep.subr.mxu0 0.0
  %173 = vmatpush1.msra.mxu0 %v120
  %174 = vmatprep.subr.mxu0 0.0
  %175 = vmatpush2.msra.mxu0 0.0
  %176 = vmatprep.subr.mxu0 0.0
  %177 = vmatpush2.msra.mxu0 0.0
  %178 = vmatprep.subr.mxu0 0.0
  %179 = vmatpush2.msra.mxu0 0.0
  %180 = vmatprep.subr.mxu0 0.0
  %181 = vmatpush2.msra.mxu0 0.0
  %182 = vmatprep.subr.mxu0 0.0
  %183 = vmatpush2.msra.mxu0 0.0
  %184 = vmatprep.subr.mxu0 0.0
  %185 = vmatpush2.msra.mxu0 0.0
  %186 = vmatprep.subr.mxu0 0.0
  %187 = vmatpush2.msra.mxu0 0.0
  %188 = vmatprep.subr.mxu0 0.0
  %189 = vmatpush2.msra.mxu0 0.0
  %190 = vmatprep.subr.mxu0 0.0
  %191 = vmatpush2.msra.mxu0 0.0
  %192 = vmatprep.subr.mxu0 0.0
  %193 = vmatpush2.msra.mxu0 0.0
  %194 = vmatprep.subr.mxu0 0.0
  %195 = vmatpush2.msra.mxu0 0.0
  %196 = vmatprep.subr.mxu0 0.0
  %197 = vmatpush2.msra.mxu0 0.0
  %198 = vmatprep.subr.mxu0 0.0
  %199 = vmatpush2.msra.mxu0 0.0
  %200 = vmatprep.subr.mxu0 0.0
  %201 = vmatpush2.msra.mxu0 0.0
  %202 = vmatprep.subr.mxu0 0.0
  %203 = vmatpush2.msra.mxu0 0.0
  %204 = vmatprep.subr.mxu0 0.0
  %205 = vmatpush2.msra.mxu0 0.0
  %206 = vmatprep.mubr.f32.mxu0 0.0
  %207 = vmatmul.mubr.f32.gmra.mxu0 %v137
  %v208 = vpop.f32.mrf.mxu0
  %v209 = vadd.f32 %v133, %v208
  %v210 = vpop.f32.mrf.mxu0
  %211 = vmatprep.mubr.f32.mxu0 0.0
  %212 = vmatmul.mubr.f32.gmra.mxu0 %v140
  %v213 = vpop.f32.mrf.mxu0
  %v214 = vadd.f32 %v133, %v213
  %v215 = vpop.f32.mrf.mxu0
  %216 = vdwg.mxu0
  %v217 = vmax.f32 %v209, 0.0
  %v218 = vmax.f32 %v214, 0.0
  %v219 = vld [vmem:[%s5] sm:$0xff]
  %v220 = vld [vmem:[%s5 + $0x8] sm:$0xff]
  %v221 = vld [vmem:[%s5 + $0x10] sm:$0xff]
  %v222 = vld [vmem:[%s5 + $0x18] sm:$0xff]
  %v223 = vld [vmem:[%s5 + $0x20] sm:$0xff]
  %v224 = vld [vmem:[%s5 + $0x28] sm:$0xff]
  %v225 = vld [vmem:[%s5 + $0x30] sm:$0xff]
  %v226 = vld [vmem:[%s5 + $0x38] sm:$0xff]
  %v227 = vld [vmem:[%s6] sm:$0x1]
  %v229 = vlaneseq
  %v230 = vshrl.u32 %v229, 7
  %v231 = vsub.s32 0, %v230
  %v232 = vrot.slane %v227, %v231
  %v235 = vsel %vm135, %v217, 0
  %v238 = vsel %vm135, %v218, 0
  %240 = vmatprep.subr.mxu0 0.0
  %241 = vmatpush1.msra.mxu0 0.0
  %242 = vmatprep.subr.mxu0 0.0
  %243 = vmatpush1.msra.mxu0 0.0
  %244 = vmatprep.subr.mxu0 0.0
  %245 = vmatpush1.msra.mxu0 0.0
  %246 = vmatprep.subr.mxu0 0.0
  %247 = vmatpush1.msra.mxu0 0.0
  %248 = vmatprep.subr.mxu0 0.0
  %249 = vmatpush1.msra.mxu0 0.0
  %250 = vmatprep.subr.mxu0 0.0
  %251 = vmatpush1.msra.mxu0 0.0
  %252 = vmatprep.subr.mxu0 0.0
  %253 = vmatpush1.msra.mxu0 0.0
  %254 = vmatprep.subr.mxu0 0.0
  %255 = vmatpush1.msra.mxu0 0.0
  %256 = vmatprep.subr.mxu0 0.0
  %257 = vmatpush1.msra.mxu0 %v226
  %258 = vmatprep.subr.mxu0 0.0
  %259 = vmatpush1.msra.mxu0 %v225
  %260 = vmatprep.subr.mxu0 0.0
  %261 = vmatpush1.msra.mxu0 %v224
  %262 = vmatprep.subr.mxu0 0.0
  %263 = vmatpush1.msra.mxu0 %v223
  %264 = vmatprep.subr.mxu0 0.0
  %265 = vmatpush1.msra.mxu0 %v222
  %266 = vmatprep.subr.mxu0 0.0
  %267 = vmatpush1.msra.mxu0 %v221
  %268 = vmatprep.subr.mxu0 0.0
  %269 = vmatpush1.msra.mxu0 %v220
  %270 = vmatprep.subr.mxu0 0.0
  %271 = vmatpush1.msra.mxu0 %v219
  %272 = vmatprep.subr.mxu0 0.0
  %273 = vmatpush2.msra.mxu0 0.0
  %274 = vmatprep.subr.mxu0 0.0
  %275 = vmatpush2.msra.mxu0 0.0
  %276 = vmatprep.subr.mxu0 0.0
  %277 = vmatpush2.msra.mxu0 0.0
  %278 = vmatprep.subr.mxu0 0.0
  %279 = vmatpush2.msra.mxu0 0.0
  %280 = vmatprep.subr.mxu0 0.0
  %281 = vmatpush2.msra.mxu0 0.0
  %282 = vmatprep.subr.mxu0 0.0
  %283 = vmatpush2.msra.mxu0 0.0
  %284 = vmatprep.subr.mxu0 0.0
  %285 = vmatpush2.msra.mxu0 0.0
  %286 = vmatprep.subr.mxu0 0.0
  %287 = vmatpush2.msra.mxu0 0.0
  %288 = vmatprep.subr.mxu0 0.0
  %289 = vmatpush2.msra.mxu0 0.0
  %290 = vmatprep.subr.mxu0 0.0
  %291 = vmatpush2.msra.mxu0 0.0
  %292 = vmatprep.subr.mxu0 0.0
  %293 = vmatpush2.msra.mxu0 0.0
  %294 = vmatprep.subr.mxu0 0.0
  %295 = vmatpush2.msra.mxu0 0.0
  %296 = vmatprep.subr.mxu0 0.0
  %297 = vmatpush2.msra.mxu0 0.0
  %298 = vmatprep.subr.mxu0 0.0
  %299 = vmatpush2.msra.mxu0 0.0
  %300 = vmatprep.subr.mxu0 0.0
  %301 = vmatpush2.msra.mxu0 0.0
  %302 = vmatprep.subr.mxu0 0.0
  %303 = vmatpush2.msra.mxu0 0.0
  %304 = vmatprep.mubr.f32.mxu0 0.0
  %305 = vmatmul.mubr.f32.gmra.mxu0 %v235
  %v306 = vpop.f32.mrf.mxu0
  %v307 = vadd.f32 %v232, %v306
  %v308 = vpop.f32.mrf.mxu0
  %309 = vmatprep.mubr.f32.mxu0 0.0
  %310 = vmatmul.mubr.f32.gmra.mxu0 %v238
  %v311 = vpop.f32.mrf.mxu0
  %v312 = vadd.f32 %v232, %v311
  %v313 = vpop.f32.mrf.mxu0
  %314 = vdwg.mxu0
  %v315 = vmax.f32 %v307, 0.0
  %v316 = vmax.f32 %v312, 0.0
  %vm317 = vcmask 31744
  %318 = vst.msk [vmem:[%s7] sm:$0xff] %vm317, %v315
  %319 = vst.msk [vmem:[%s7 + $0x8] sm:$0xff] %vm317, %v316
  // Predicated region
  $region30: #{tpu_custom_call.1} parent=0 // pred_check
    _
  $region31: #{tpu_custom_call.1} parent=0 // pred_check_branch
    %321 = sbr.rel (0) target = $region33
  $region32: #{tpu_custom_call.1} parent=0 // pred_region
    _
  $region33: #{tpu_custom_call.1} parent=0 // pred_fallthru
    _
  // Predicated region
  $region34: #{tpu_custom_call.1} parent=0 // pred_check
    _
  $region35: #{tpu_custom_call.1} parent=0 // pred_check_branch
    %323 = sbr.rel (0) target = $region37
  $region36: #{tpu_custom_call.1} parent=0 // pred_region
    _
  $region37: #{tpu_custom_call.1} parent=0 // pred_fallthru
    _

</llo_original>
